<compile_context>
chip_gen: v6e
topology: v6e:2x2x1
jax: 0.10.0
libtpu: 0.0.40
codegen_flags: <defaults>
</compile_context>

<pallas_src>
from functools import partial

import jax
import jax.numpy as jnp
from jax.experimental import pallas as pl
from jax.experimental.pallas import tpu as pltpu

state_dim = 12
hidden_dim = 128
action_dim = 5          # = radius
OUT_PAD = 8             # action dim padded to one sublane tile


def _round_up(x, m):
    return ((x + m - 1) // m) * m


def qnet_kernel(xt_ref, w1t_ref, b1_ref, w2t_ref, b2_ref, o_ref):
    # xt_ref : (state_dim, TB)  bf16   -- batch on lanes
    # w1t_ref: (hidden, state)  bf16   -- w1^T, resident
    # b1_ref : (hidden, 1)      f32    -- resident
    # w2t_ref: (OUT_PAD, hidden) bf16  -- w2^T zero-padded to 8 rows, resident
    # b2_ref : (OUT_PAD, 1)     f32    -- zero-padded, resident
    # o_ref  : (OUT_PAD, TB)    f32    -- lane-dense store
    h = jnp.dot(w1t_ref[...], xt_ref[...],
                preferred_element_type=jnp.float32)            # (128, TB)  fc1
    h = jnp.maximum(h + b1_ref[...], 0.0)                      # +b1, ReLU (VPU)
    out = jnp.dot(w2t_ref[...], h.astype(jnp.bfloat16),
                  preferred_element_type=jnp.float32)          # (8, TB)    fc2
    o_ref[...] = (out + b2_ref[...]).astype(o_ref.dtype)


def pack_params(w1, b1, w2, b2):
    """Pack [in,out]-layout params into the kernel's transposed layout (once)."""
    w1t = jnp.asarray(w1, jnp.float32).T.astype(jnp.bfloat16)          # (128, 12)
    b1c = jnp.asarray(b1, jnp.float32).reshape(hidden_dim, 1)          # (128, 1)
    w2t = jnp.zeros((OUT_PAD, hidden_dim), jnp.bfloat16)
    w2t = w2t.at[:action_dim, :].set(jnp.asarray(w2, jnp.float32).T.astype(jnp.bfloat16))
    b2c = jnp.zeros((OUT_PAD, 1), jnp.float32)
    b2c = b2c.at[:action_dim, 0].set(jnp.asarray(b2, jnp.float32).reshape(-1))
    return w1t, b1c, w2t, b2c


def _choose_tb(B, block_b):
    block_b = max(128, (block_b // 128) * 128)      # lane dim -> multiple of 128
    b128 = _round_up(B, 128)
    tb = min(block_b, b128)
    # v7x dual-TC: prefer >= 2 grid steps on the "parallel" batch axis when possible.
    if tb == b128 and b128 >= 256:
        tb = _round_up(b128 // 2, 128)
    return tb


@partial(jax.jit, static_argnames=("block_b",))
def qnet_forward(x, w1t, b1c, w2t, b2c, *, block_b=2048):
    """x: (B, state_dim) float32  ->  (B, action_dim) float32."""
    B = x.shape[0]
    tb = _choose_tb(B, block_b)
    bp = _round_up(B, tb)

    xb = x.astype(jnp.bfloat16)
    if bp != B:
        xb = jnp.pad(xb, ((0, bp - B), (0, 0)))
    x_t = xb.T                                               # (state_dim, bp)

    out_t = pl.pallas_call(
        qnet_kernel,
        out_shape=jax.ShapeDtypeStruct((OUT_PAD, bp), jnp.float32),
        grid=(bp // tb,),
        in_specs=[
            pl.BlockSpec((state_dim, tb), lambda i: (0, i)),          # x^T tile (pipelined)
            pl.BlockSpec((hidden_dim, state_dim), lambda i: (0, 0)),  # resident w1^T
            pl.BlockSpec((hidden_dim, 1), lambda i: (0, 0)),          # resident b1
            pl.BlockSpec((OUT_PAD, hidden_dim), lambda i: (0, 0)),    # resident w2^T (padded)
            pl.BlockSpec((OUT_PAD, 1), lambda i: (0, 0)),             # resident b2 (padded)
        ],
        out_specs=pl.BlockSpec((OUT_PAD, tb), lambda i: (0, i)),      # lane-dense (8, TB)
        compiler_params=pltpu.CompilerParams(
            dimension_semantics=("parallel",),                        # dual-TC on v7x
        ),
    )(x_t, w1t, b1c, w2t, b2c)
    return out_t[:action_dim, :B].T                                   # (B, action_dim)


def init_params(key):
    # Deterministic init mimicking torch.nn.Linear default:
    # U(-1/sqrt(fan_in), 1/sqrt(fan_in)) for both weights and biases.
    k1, k2, k3, k4 = jax.random.split(key, 4)
    bound1 = 1.0 / jnp.sqrt(jnp.float32(state_dim))
    bound2 = 1.0 / jnp.sqrt(jnp.float32(hidden_dim))
    w1 = jax.random.uniform(k1, (state_dim, hidden_dim), jnp.float32, -bound1, bound1)
    b1 = jax.random.uniform(k2, (1, hidden_dim), jnp.float32, -bound1, bound1)
    w2 = jax.random.uniform(k3, (hidden_dim, action_dim), jnp.float32, -bound2, bound2)
    b2 = jax.random.uniform(k4, (1, action_dim), jnp.float32, -bound2, bound2)
    return w1, b1, w2, b2


def _reference(x, w1, b1, w2, b2):
    return jnp.maximum(x @ w1 + b1, 0.0) @ w2 + b2


if __name__ == "__main__":
    key = jax.random.PRNGKey(0)
    kx, kp, kx2, kx3 = jax.random.split(key, 4)
    w1, b1, w2, b2 = init_params(kp)
    params = pack_params(w1, b1, w2, b2)

    # bf16 matmul operands -> compare against the f32 reference with a relaxed
    # tolerance (errors are ~1e-3 rms at these value scales).
    TOL = 5e-2

    # Small inference-style batch (single grid step).
    B = 8
    x = jax.random.normal(kx, (B, state_dim), jnp.float32)
    out = jax.block_until_ready(qnet_forward(x, *params))
    ref = _reference(x, w1, b1, w2, b2)
    assert out.shape == (B, action_dim)
    assert jnp.allclose(out, ref, atol=TOL, rtol=TOL)

    # Ragged batch exercising the remainder-padding path.
    B2 = 37
    x2 = jax.random.normal(kx2, (B2, state_dim), jnp.float32)
    out2 = jax.block_until_ready(qnet_forward(x2, *params, block_b=256))
    ref2 = _reference(x2, w1, b1, w2, b2)
    assert out2.shape == (B2, action_dim)
    assert jnp.allclose(out2, ref2, atol=TOL, rtol=TOL)

    # Larger batch exercising the multi-tile grid (>= 2 steps, dual-TC path on v7x).
    B3 = 300
    x3 = jax.random.normal(kx3, (B3, state_dim), jnp.float32)
    out3 = jax.block_until_ready(qnet_forward(x3, *params))
    ref3 = _reference(x3, w1, b1, w2, b2)
    assert out3.shape == (B3, action_dim)
    assert jnp.allclose(out3, ref3, atol=TOL, rtol=TOL)

    print("KERNEL_OK")
</pallas_src>

<mosaic_0001>
module attributes {stable_mosaic.version = 11 : i64} {
  func.func @qnet_kernel(%arg0: i32, %arg1: memref<12x128xbf16, #tpu.memory_space<vmem>>, %arg2: memref<128x12xbf16, #tpu.memory_space<vmem>>, %arg3: memref<128x1xf32, #tpu.memory_space<vmem>>, %arg4: memref<8x128xbf16, #tpu.memory_space<vmem>>, %arg5: memref<8x1xf32, #tpu.memory_space<vmem>>, %arg6: memref<8x128xf32, #tpu.memory_space<vmem>>) attributes {dimension_semantics = [#tpu.dimension_semantics<parallel>], iteration_bounds = array<i64: 1>, scalar_prefetch = 0 : i64, scratch_operands = 0 : i64, tpu.core_type = #tpu.core_type<tc>, window_params = [{transform_indices = @transform_0, window_bounds = array<i64: 12, 128>}, {pipeline_mode = #tpu.pipeline_mode<synchronous>, transform_indices = @transform_1, window_bounds = array<i64: 128, 12>}, {pipeline_mode = #tpu.pipeline_mode<synchronous>, transform_indices = @transform_2, window_bounds = array<i64: 128, 1>}, {pipeline_mode = #tpu.pipeline_mode<synchronous>, transform_indices = @transform_3, window_bounds = array<i64: 8, 128>}, {pipeline_mode = #tpu.pipeline_mode<synchronous>, transform_indices = @transform_4, window_bounds = array<i64: 8, 1>}, {transform_indices = @transform_5, window_bounds = array<i64: 8, 128>}]} {
    %c0 = arith.constant 0 : index
    %c0_0 = arith.constant 0 : index
    %0 = vector.load %arg2[%c0, %c0_0] : memref<128x12xbf16, #tpu.memory_space<vmem>>, vector<128x12xbf16>
    %c0_1 = arith.constant 0 : index
    %c0_2 = arith.constant 0 : index
    %1 = vector.load %arg1[%c0_1, %c0_2] : memref<12x128xbf16, #tpu.memory_space<vmem>>, vector<12x128xbf16>
    %cst = arith.constant dense<0.000000e+00> : vector<128x128xf32>
    %2 = tpu.matmul %0, %1, %cst {dimension_numbers = #tpu.dot_dimension_numbers<[1], [0], [0], [1], [0, 0, 1, 1], [], []>} : vector<128x12xbf16>, vector<12x128xbf16>, vector<128x128xf32> -> vector<128x128xf32>
    %c0_3 = arith.constant 0 : index
    %c0_4 = arith.constant 0 : index
    %3 = vector.load %arg3[%c0_3, %c0_4] : memref<128x1xf32, #tpu.memory_space<vmem>>, vector<128x1xf32>
    %4 = vector.broadcast %3 : vector<128x1xf32> to vector<128x128xf32>
    %5 = arith.addf %2, %4 : vector<128x128xf32>
    %cst_5 = arith.constant 0.000000e+00 : f32
    %6 = vector.broadcast %cst_5 : f32 to vector<128x128xf32>
    %7 = arith.maximumf %5, %6 : vector<128x128xf32>
    %c0_6 = arith.constant 0 : index
    %c0_7 = arith.constant 0 : index
    %8 = vector.load %arg4[%c0_6, %c0_7] : memref<8x128xbf16, #tpu.memory_space<vmem>>, vector<8x128xbf16>
    %9 = arith.truncf %7 : vector<128x128xf32> to vector<128x128xbf16>
    %cst_8 = arith.constant dense<0.000000e+00> : vector<8x128xf32>
    %10 = tpu.matmul %8, %9, %cst_8 {dimension_numbers = #tpu.dot_dimension_numbers<[1], [0], [0], [1], [0, 0, 1, 1], [], []>} : vector<8x128xbf16>, vector<128x128xbf16>, vector<8x128xf32> -> vector<8x128xf32>
    %c0_9 = arith.constant 0 : index
    %c0_10 = arith.constant 0 : index
    %11 = vector.load %arg5[%c0_9, %c0_10] : memref<8x1xf32, #tpu.memory_space<vmem>>, vector<8x1xf32>
    %12 = vector.broadcast %11 : vector<8x1xf32> to vector<8x128xf32>
    %13 = arith.addf %10, %12 : vector<8x128xf32>
    %c0_11 = arith.constant 0 : index
    %c0_12 = arith.constant 0 : index
    %14 = vector.load %arg6[%c0_11, %c0_12] : memref<8x128xf32, #tpu.memory_space<vmem>>, vector<8x128xf32>
    tpu.vector_store %arg6[%c0_11, %c0_12], %13 {strides = array<i32>} : memref<8x128xf32, #tpu.memory_space<vmem>>, vector<8x128xf32>,
    return
  }
  func.func @transform_0(%arg0: i32) -> (i32, i32) {
    %c0_i32 = arith.constant 0 : i32
    %c0_i32_0 = arith.constant 0 : i32
    return %c0_i32, %arg0 : i32, i32
  }
  func.func @transform_1(%arg0: i32) -> (i32, i32) {
    %c0_i32 = arith.constant 0 : i32
    %c0_i32_0 = arith.constant 0 : i32
    %c0_i32_1 = arith.constant 0 : i32
    return %c0_i32, %c0_i32_0 : i32, i32
  }
  func.func @transform_2(%arg0: i32) -> (i32, i32) {
    %c0_i32 = arith.constant 0 : i32
    %c0_i32_0 = arith.constant 0 : i32
    %c0_i32_1 = arith.constant 0 : i32
    return %c0_i32, %c0_i32_0 : i32, i32
  }
  func.func @transform_3(%arg0: i32) -> (i32, i32) {
    %c0_i32 = arith.constant 0 : i32
    %c0_i32_0 = arith.constant 0 : i32
    %c0_i32_1 = arith.constant 0 : i32
    return %c0_i32, %c0_i32_0 : i32, i32
  }
  func.func @transform_4(%arg0: i32) -> (i32, i32) {
    %c0_i32 = arith.constant 0 : i32
    %c0_i32_0 = arith.constant 0 : i32
    %c0_i32_1 = arith.constant 0 : i32
    return %c0_i32, %c0_i32_0 : i32, i32
  }
  func.func @transform_5(%arg0: i32) -> (i32, i32) {
    %c0_i32 = arith.constant 0 : i32
    %c0_i32_0 = arith.constant 0 : i32
    return %c0_i32, %arg0 : i32, i32
  }
}

</mosaic_0001>

<llo_original>
// kernel: qnet_forward.1
$region0: #{qnet_forward.1}
  #allocation0 [shape = 'u32[]', space=smem, size = 0x4, offset = 0x4, fixed_abs, tag = 'smem constant byte address 0x4 - core index']
  #allocation1 [shape = 'u32[144,128]{1,0:T(1,128)}', space=vmem, size = 0x12000, scoped, tag = 'internal scratch']
  %s0 = inlined_call_operand.vmem [shape: bf16[12,128], index: 0, kind: input, shape index: {}]
  %s1 = inlined_call_operand.vmem [shape: bf16[128,12], index: 1, kind: input, shape index: {}]
  %s2 = inlined_call_operand.vmem [shape: f32[128,1], index: 2, kind: input, shape index: {}]
  %s3 = inlined_call_operand.vmem [shape: bf16[8,128], index: 3, kind: input, shape index: {}]
  %s4 = inlined_call_operand.vmem [shape: f32[8,1], index: 4, kind: input, shape index: {}]
  %s5 = inlined_call_operand.vmem [shape: f32[8,128], index: 5, kind: output, shape index: {}]
  %s6 = sld [smem:[#allocation0]]
  $region30: #{qnet_forward.1} parent=0
    _
  %s8 = ssub.s32 1, %s6
  %s9 = scalar_select 0, %s8, %s6
  // Predicated region
  $region2: #{qnet_forward.1} parent=0 // pred_check
    _
  $region3: #{qnet_forward.1} parent=0 // pred_check_branch
    %11 = sbr.rel (0) target = $region5
  $region4: #{qnet_forward.1} parent=0 // pred_region
    _
  $region5: #{qnet_forward.1} parent=0 // pred_fallthru
    _
  // Predicated region
  $region6: #{qnet_forward.1} parent=0 // pred_check
    _
  $region7: #{qnet_forward.1} parent=0 // pred_check_branch
    %13 = sbr.rel (0) target = $region9
  $region8: #{qnet_forward.1} parent=0 // pred_region
    _
  $region9: #{qnet_forward.1} parent=0 // pred_fallthru
    _
  // Predicated region
  $region10: #{qnet_forward.1} parent=0 // pred_check
    _
  $region11: #{qnet_forward.1} parent=0 // pred_check_branch
    %15 = sbr.rel (0) target = $region13
  $region12: #{qnet_forward.1} parent=0 // pred_region
    _
  $region13: #{qnet_forward.1} parent=0 // pred_fallthru
    _
  // Predicated region
  $region14: #{qnet_forward.1} parent=0 // pred_check
    _
  $region15: #{qnet_forward.1} parent=0 // pred_check_branch
    %17 = sbr.rel (0) target = $region17
  $region16: #{qnet_forward.1} parent=0 // pred_region
    _
  $region17: #{qnet_forward.1} parent=0 // pred_fallthru
    _
  // Predicated region
  $region18: #{qnet_forward.1} parent=0 // pred_check
    _
  $region19: #{qnet_forward.1} parent=0 // pred_check_branch
    %19 = sbr.rel (0) target = $region21
  $region20: #{qnet_forward.1} parent=0 // pred_region
    _
  $region21: #{qnet_forward.1} parent=0 // pred_fallthru
    _
  %v21 = vld [vmem:[%s1] sm:$0xf]
  %v22 = vld [vmem:[%s1 + $0x4] sm:$0xf]
  %v23 = vld [vmem:[%s1 + $0x8] sm:$0xf]
  %v24 = vld [vmem:[%s1 + $0xc] sm:$0xf]
  %v25 = vld [vmem:[%s1 + $0x10] sm:$0xf]
  %v26 = vld [vmem:[%s1 + $0x14] sm:$0xf]
  %v27 = vld [vmem:[%s1 + $0x18] sm:$0xf]
  %v28 = vld [vmem:[%s1 + $0x1c] sm:$0xf]
  %v29 = vld [vmem:[%s1 + $0x20] sm:$0xf]
  %v30 = vld [vmem:[%s1 + $0x24] sm:$0xf]
  %v31 = vld [vmem:[%s1 + $0x28] sm:$0xf]
  %v32 = vld [vmem:[%s1 + $0x2c] sm:$0xf]
  %v33 = vld [vmem:[%s1 + $0x30] sm:$0xf]
  %v34 = vld [vmem:[%s1 + $0x34] sm:$0xf]
  %v35 = vld [vmem:[%s1 + $0x38] sm:$0xf]
  %v36 = vld [vmem:[%s1 + $0x3c] sm:$0xf]
  %v37 = vld [vmem:[%s0] sm:$0xf]
  %v38 = vld [vmem:[%s0 + $0x4] sm:$0x3]
  %v39 = vld [vmem:[%s2] sm:$0xff]
  %v40 = vld [vmem:[%s2 + $0x8] sm:$0xff]
  %v41 = vld [vmem:[%s2 + $0x10] sm:$0xff]
  %v42 = vld [vmem:[%s2 + $0x18] sm:$0xff]
  %v43 = vld [vmem:[%s2 + $0x20] sm:$0xff]
  %v44 = vld [vmem:[%s2 + $0x28] sm:$0xff]
  %v45 = vld [vmem:[%s2 + $0x30] sm:$0xff]
  %v46 = vld [vmem:[%s2 + $0x38] sm:$0xff]
  %v47 = vld [vmem:[%s2 + $0x40] sm:$0xff]
  %v48 = vld [vmem:[%s2 + $0x48] sm:$0xff]
  %v49 = vld [vmem:[%s2 + $0x50] sm:$0xff]
  %v50 = vld [vmem:[%s2 + $0x58] sm:$0xff]
  %v51 = vld [vmem:[%s2 + $0x60] sm:$0xff]
  %v52 = vld [vmem:[%s2 + $0x68] sm:$0xff]
  %v53 = vld [vmem:[%s2 + $0x70] sm:$0xff]
  %v54 = vld [vmem:[%s2 + $0x78] sm:$0xff]
  %56 = vset.pattern.permute.xlu0 0
  %57 = vperm.xlu0 %56, %v39
  %v58 = vpop.permute.xlu0 %57
  %61 = vset.pattern.permute.xlu0 0
  %62 = vperm.xlu0 %61, %v40
  %v63 = vpop.permute.xlu0 %62
  %66 = vset.pattern.permute.xlu0 0
  %67 = vperm.xlu0 %66, %v41
  %v68 = vpop.permute.xlu0 %67
  %71 = vset.pattern.permute.xlu0 0
  %72 = vperm.xlu0 %71, %v42
  %v73 = vpop.permute.xlu0 %72
  %76 = vset.pattern.permute.xlu0 0
  %77 = vperm.xlu0 %76, %v43
  %v78 = vpop.permute.xlu0 %77
  %81 = vset.pattern.permute.xlu0 0
  %82 = vperm.xlu0 %81, %v44
  %v83 = vpop.permute.xlu0 %82
  %86 = vset.pattern.permute.xlu0 0
  %87 = vperm.xlu0 %86, %v45
  %v88 = vpop.permute.xlu0 %87
  %91 = vset.pattern.permute.xlu0 0
  %92 = vperm.xlu0 %91, %v46
  %v93 = vpop.permute.xlu0 %92
  %96 = vset.pattern.permute.xlu0 0
  %97 = vperm.xlu0 %96, %v47
  %v98 = vpop.permute.xlu0 %97
  %101 = vset.pattern.permute.xlu0 0
  %102 = vperm.xlu0 %101, %v48
  %v103 = vpop.permute.xlu0 %102
  %106 = vset.pattern.permute.xlu0 0
  %107 = vperm.xlu0 %106, %v49
  %v108 = vpop.permute.xlu0 %107
  %111 = vset.pattern.permute.xlu0 0
  %112 = vperm.xlu0 %111, %v50
  %v113 = vpop.permute.xlu0 %112
  %116 = vset.pattern.permute.xlu0 0
  %117 = vperm.xlu0 %116, %v51
  %v118 = vpop.permute.xlu0 %117
  %121 = vset.pattern.permute.xlu0 0
  %122 = vperm.xlu0 %121, %v52
  %v123 = vpop.permute.xlu0 %122
  %126 = vset.pattern.permute.xlu0 0
  %127 = vperm.xlu0 %126, %v53
  %v128 = vpop.permute.xlu0 %127
  %131 = vset.pattern.permute.xlu0 0
  %132 = vperm.xlu0 %131, %v54
  %v133 = vpop.permute.xlu0 %132
  %v151 = vunpack.c.l.b16 %v21
  %v152 = vunpack.c.l.b16 %v22
  %v153 = vunpack.c.l.b16 %v23
  %v154 = vunpack.c.l.b16 %v24
  %v155 = vunpack.c.l.b16 %v25
  %v156 = vunpack.c.l.b16 %v26
  %v157 = vunpack.c.l.b16 %v27
  %v158 = vunpack.c.l.b16 %v28
  %v159 = vunpack.c.l.b16 %v29
  %v160 = vunpack.c.l.b16 %v30
  %v161 = vunpack.c.l.b16 %v31
  %v162 = vunpack.c.l.b16 %v32
  %v163 = vunpack.c.l.b16 %v33
  %v164 = vunpack.c.l.b16 %v34
  %v165 = vunpack.c.l.b16 %v35
  %v166 = vunpack.c.l.b16 %v36
  %v167 = vpack.c.b16 %v152, %v151
  %v168 = vpack.c.b16 %v154, %v153
  %v169 = vpack.c.b16 %v156, %v155
  %v170 = vpack.c.b16 %v158, %v157
  %v171 = vpack.c.b16 %v160, %v159
  %v172 = vpack.c.b16 %v162, %v161
  %v173 = vpack.c.b16 %v164, %v163
  %v174 = vpack.c.b16 %v166, %v165
  %v177 = vunpack.c.l.b16 %v37
  %v178 = vunpack.c.l.b16 %v38
  %v179 = vpack.c.b16 %v178, %v177
  %vm180 = vcmask 97280
  %v182 = vsel %vm180, %v167, 0
  %v185 = vsel %vm180, %v168, 0
  %v188 = vsel %vm180, %v169, 0
  %v191 = vsel %vm180, %v170, 0
  %v194 = vsel %vm180, %v171, 0
  %v197 = vsel %vm180, %v172, 0
  %v200 = vsel %vm180, %v173, 0
  %v203 = vsel %vm180, %v174, 0
  %vm205 = vcmask 1045504
  %v207 = vsel %vm205, %v179, 0
  %209 = vmatprep.subr.bf16.mxu0 0
  %210 = vmatpush1.bf16.msra.mxu0 0
  %211 = vmatprep.subr.bf16.mxu0 0
  %212 = vmatpush1.bf16.msra.mxu0 0
  %213 = vmatprep.subr.bf16.mxu0 0
  %214 = vmatpush1.bf16.msra.mxu0 0
  %215 = vmatprep.subr.bf16.mxu0 0
  %216 = vmatpush1.bf16.msra.mxu0 0
  %217 = vmatprep.subr.bf16.mxu0 0
  %218 = vmatpush1.bf16.msra.mxu0 0
  %219 = vmatprep.subr.bf16.mxu0 0
  %220 = vmatpush1.bf16.msra.mxu0 0
  %221 = vmatprep.subr.bf16.mxu0 0
  %222 = vmatpush1.bf16.msra.mxu0 0
  %223 = vmatprep.subr.bf16.mxu0 0
  %224 = vmatpush1.bf16.msra.mxu0 %v207
  %225 = vmatprep.subr.bf16.mxu0 0
  %226 = vmatpush2.bf16.msra.mxu0 0
  %227 = vmatprep.subr.bf16.mxu0 0
  %228 = vmatpush2.bf16.msra.mxu0 0
  %229 = vmatprep.subr.bf16.mxu0 0
  %230 = vmatpush2.bf16.msra.mxu0 0
  %231 = vmatprep.subr.bf16.mxu0 0
  %232 = vmatpush2.bf16.msra.mxu0 0
  %233 = vmatprep.subr.bf16.mxu0 0
  %234 = vmatpush2.bf16.msra.mxu0 0
  %235 = vmatprep.subr.bf16.mxu0 0
  %236 = vmatpush2.bf16.msra.mxu0 0
  %237 = vmatprep.subr.bf16.mxu0 0
  %238 = vmatpush2.bf16.msra.mxu0 0
  %239 = vmatprep.subr.bf16.mxu0 0
  %240 = vmatpush2.bf16.msra.mxu0 0
  %241 = vmatprep.mubr.bf16.mxu0 0
  %242 = vmatmul.mubr.bf16.gmra.mxu0 %v182
  %v243 = vpop.f32.mrf.mxu0
  %v244 = vadd.f32 %v58, %v243
  %v245 = vpop.f32.mrf.mxu0
  %v246 = vpop.f32.mrf.mxu0
  %v247 = vadd.f32 %v63, %v246
  %v248 = vpop.f32.mrf.mxu0
  %249 = vmatprep.mubr.bf16.mxu0 0
  %250 = vmatmul.mubr.bf16.gmra.mxu0 %v185
  %v251 = vpop.f32.mrf.mxu0
  %v252 = vadd.f32 %v68, %v251
  %v253 = vpop.f32.mrf.mxu0
  %v254 = vpop.f32.mrf.mxu0
  %v255 = vadd.f32 %v73, %v254
  %v256 = vpop.f32.mrf.mxu0
  %257 = vmatprep.mubr.bf16.mxu0 0
  %258 = vmatmul.mubr.bf16.gmra.mxu0 %v188
  %v259 = vpop.f32.mrf.mxu0
  %v260 = vadd.f32 %v78, %v259
  %v261 = vpop.f32.mrf.mxu0
  %v262 = vpop.f32.mrf.mxu0
  %v263 = vadd.f32 %v83, %v262
  %v264 = vpop.f32.mrf.mxu0
  %265 = vmatprep.mubr.bf16.mxu0 0
  %266 = vmatmul.mubr.bf16.gmra.mxu0 %v191
  %v267 = vpop.f32.mrf.mxu0
  %v268 = vadd.f32 %v88, %v267
  %v269 = vpop.f32.mrf.mxu0
  %v270 = vpop.f32.mrf.mxu0
  %v271 = vadd.f32 %v93, %v270
  %v272 = vpop.f32.mrf.mxu0
  %273 = vmatprep.mubr.bf16.mxu0 0
  %274 = vmatmul.mubr.bf16.gmra.mxu0 %v194
  %v275 = vpop.f32.mrf.mxu0
  %v276 = vadd.f32 %v98, %v275
  %v277 = vpop.f32.mrf.mxu0
  %v278 = vpop.f32.mrf.mxu0
  %v279 = vadd.f32 %v103, %v278
  %v280 = vpop.f32.mrf.mxu0
  %281 = vmatprep.mubr.bf16.mxu0 0
  %282 = vmatmul.mubr.bf16.gmra.mxu0 %v197
  %v283 = vpop.f32.mrf.mxu0
  %v284 = vadd.f32 %v108, %v283
  %v285 = vpop.f32.mrf.mxu0
  %v286 = vpop.f32.mrf.mxu0
  %v287 = vadd.f32 %v113, %v286
  %v288 = vpop.f32.mrf.mxu0
  %289 = vmatprep.mubr.bf16.mxu0 0
  %290 = vmatmul.mubr.bf16.gmra.mxu0 %v200
  %v291 = vpop.f32.mrf.mxu0
  %v292 = vadd.f32 %v118, %v291
  %v293 = vpop.f32.mrf.mxu0
  %v294 = vpop.f32.mrf.mxu0
  %v295 = vadd.f32 %v123, %v294
  %v296 = vpop.f32.mrf.mxu0
  %297 = vmatprep.mubr.bf16.mxu0 0
  %298 = vmatmul.mubr.bf16.gmra.mxu0 %v203
  %v299 = vpop.f32.mrf.mxu0
  %v300 = vadd.f32 %v128, %v299
  %v301 = vpop.f32.mrf.mxu0
  %v302 = vpop.f32.mrf.mxu0
  %v303 = vadd.f32 %v133, %v302
  %v304 = vpop.f32.mrf.mxu0
  %305 = vdwg.mxu0
  %v306 = vmax.f32 %v244, 0.0
  %v307 = vmax.f32 %v247, 0.0
  %v308 = vmax.f32 %v252, 0.0
  %v309 = vmax.f32 %v255, 0.0
  %v310 = vmax.f32 %v260, 0.0
  %v311 = vmax.f32 %v263, 0.0
  %v312 = vmax.f32 %v268, 0.0
  %v313 = vmax.f32 %v271, 0.0
  %v314 = vmax.f32 %v276, 0.0
  %v315 = vmax.f32 %v279, 0.0
  %v316 = vmax.f32 %v284, 0.0
  %v317 = vmax.f32 %v287, 0.0
  %v318 = vmax.f32 %v292, 0.0
  %v319 = vmax.f32 %v295, 0.0
  %v320 = vmax.f32 %v300, 0.0
  %v321 = vmax.f32 %v303, 0.0
  %v322 = vld [vmem:[%s3] sm:$0xf]
  %v323 = vpack.c.bf16 %v307, %v306
  %v324 = vpack.c.bf16 %v309, %v308
  %v325 = vpack.c.bf16 %v311, %v310
  %v326 = vpack.c.bf16 %v313, %v312
  %v327 = vpack.c.bf16 %v315, %v314
  %v328 = vpack.c.bf16 %v317, %v316
  %v329 = vpack.c.bf16 %v319, %v318
  %v330 = vpack.c.bf16 %v321, %v320
  %v331 = vld [vmem:[%s4] sm:$0xff]
  %333 = vset.pattern.permute.xlu0 0
  %334 = vperm.xlu0 %333, %v331
  %v335 = vpop.permute.xlu0 %334
  %337 = vmatprep.subr.bf16.mxu0 0
  %338 = vmatpush1.bf16.msra.mxu0 %v330
  %339 = vmatprep.subr.bf16.mxu0 0
  %340 = vmatpush1.bf16.msra.mxu0 %v329
  %341 = vmatprep.subr.bf16.mxu0 0
  %342 = vmatpush1.bf16.msra.mxu0 %v328
  %343 = vmatprep.subr.bf16.mxu0 0
  %344 = vmatpush1.bf16.msra.mxu0 %v327
  %345 = vmatprep.subr.bf16.mxu0 0
  %346 = vmatpush1.bf16.msra.mxu0 %v326
  %347 = vmatprep.subr.bf16.mxu0 0
  %348 = vmatpush1.bf16.msra.mxu0 %v325
  %349 = vmatprep.subr.bf16.mxu0 0
  %350 = vmatpush1.bf16.msra.mxu0 %v324
  %351 = vmatprep.subr.bf16.mxu0 0
  %352 = vmatpush1.bf16.msra.mxu0 %v323
  %353 = vmatprep.subr.bf16.mxu0 0
  %354 = vmatpush2.bf16.msra.mxu0 0
  %355 = vmatprep.subr.bf16.mxu0 0
  %356 = vmatpush2.bf16.msra.mxu0 0
  %357 = vmatprep.subr.bf16.mxu0 0
  %358 = vmatpush2.bf16.msra.mxu0 0
  %359 = vmatprep.subr.bf16.mxu0 0
  %360 = vmatpush2.bf16.msra.mxu0 0
  %361 = vmatprep.subr.bf16.mxu0 0
  %362 = vmatpush2.bf16.msra.mxu0 0
  %363 = vmatprep.subr.bf16.mxu0 0
  %364 = vmatpush2.bf16.msra.mxu0 0
  %365 = vmatprep.subr.bf16.mxu0 0
  %366 = vmatpush2.bf16.msra.mxu0 0
  %367 = vmatprep.subr.bf16.mxu0 0
  %368 = vmatpush2.bf16.msra.mxu0 0
  %369 = vmatprep.mubr.bf16.mxu0 0
  %370 = vmatmul.mubr.bf16.gmra.mxu0 %v322
  %v371 = vpop.f32.mrf.mxu0
  %v372 = vadd.f32 %v335, %v371
  %v373 = vpop.f32.mrf.mxu0
  %v374 = vpop.f32.mrf.mxu0
  %v375 = vpop.f32.mrf.mxu0
  %376 = vdwg.mxu0
  %377 = vst [vmem:[%s5] sm:$0xff] %v372
  // Predicated region
  $region22: #{qnet_forward.1} parent=0 // pred_check
    _
  $region23: #{qnet_forward.1} parent=0 // pred_check_branch
    %379 = sbr.rel (0) target = $region25
  $region24: #{qnet_forward.1} parent=0 // pred_region
    _
  $region25: #{qnet_forward.1} parent=0 // pred_fallthru
    _
  // Predicated region
  $region26: #{qnet_forward.1} parent=0 // pred_check
    _
  $region27: #{qnet_forward.1} parent=0 // pred_check_branch
    %381 = sbr.rel (0) target = $region29
  $region28: #{qnet_forward.1} parent=0 // pred_region
    _
  $region29: #{qnet_forward.1} parent=0 // pred_fallthru
    _

</llo_original>
